<compile_context>
chip_gen: v7x
topology: tpu7x:2x2x1
jax: 0.10.0
libtpu: 0.0.40
codegen_flags: <defaults>
</compile_context>

<pallas_src>
import functools

import jax
import jax.numpy as jnp
from jax.experimental import pallas as pl
from jax.experimental.pallas import tpu as pltpu


def _round_up(n, m):
    return ((n + m - 1) // m) * m


def _choose_tq(T, cap=256):
    """Query-tile size: full T if small, else the largest multiple of 8 <= cap dividing T."""
    if T <= cap:
        return T
    for tq in range(cap, 7, -8):
        if T % tq == 0:
            return tq
    return T


def _vmem_limit_bytes():
    kind = ""
    try:
        kind = jax.devices()[0].device_kind.lower()
    except Exception:
        pass
    if "v7" in kind:
        # 64 MiB physical VMEM per TensorCore on v7x -> leave headroom.
        return 48 * 1024 * 1024
    # v5e / v6e: 128 MiB physical; raise well past the 16/32 MiB scoped default.
    return 100 * 1024 * 1024


def _aft_full_kernel(x_ref, wqkv_ref, bqkv_ref, wp_ref, bp_ref, ew_ref,
                     out_ref, qsig_ref, kv_ref, *, hp, tq_size):
    tq = pl.program_id(1)

    # Once per batch element (tq == 0): fused QKV projection over the whole
    # sequence; stage sigmoid(Q), exp(K)*V and exp(K) into persistent VMEM
    # scratch so every query tile can reuse them.
    @pl.when(tq == 0)
    def _():
        x = x_ref[0]                                                         # (T, Dp) bf16
        qkv = jnp.dot(x, wqkv_ref[...], preferred_element_type=jnp.float32)  # bf16 MXU, f32 acc
        qkv = qkv + bqkv_ref[...]                                            # (T, 3Hp) f32
        q = qkv[:, :hp]
        k = qkv[:, hp:2 * hp]
        v = qkv[:, 2 * hp:]
        qsig_ref[...] = jax.nn.sigmoid(q)                                    # f32
        # Stabilize exp(K): a per-feature max cancels exactly in num/den.
        k = k - jnp.max(k, axis=0, keepdims=True)
        ek = jnp.exp(k)                                                      # f32 (EUP)
        kv_ref[:, :hp] = (ek * v).astype(kv_ref.dtype)                       # bf16 MXU operands
        kv_ref[:, hp:] = ek.astype(kv_ref.dtype)

    # AFT-full weighting for this query tile: one MXU matmul yields both the
    # numerator and the denominator (shared (TQ, T) LHS, 2*Hp RHS columns).
    nd = jnp.dot(ew_ref[...], kv_ref[...], preferred_element_type=jnp.float32)  # (TQ, 2Hp)
    num = nd[:, :hp]
    den = nd[:, hp:]

    row0 = pl.multiple_of(tq * tq_size, tq_size)
    q_sig = qsig_ref[pl.ds(row0, tq_size), :]                                # (TQ, Hp) f32
    yt = q_sig * num * pl.reciprocal(den, approx=True)                       # divide -> EUP recip

    out = jnp.dot(yt.astype(jnp.bfloat16), wp_ref[...],
                  preferred_element_type=jnp.float32) + bp_ref[...]          # (TQ, Dp)
    out_ref[0] = out.astype(out_ref.dtype)


@jax.jit
def aft_full_forward(x, wq, bq, wk, bk, wv, bv, wp, bp, wbias):
    B, T, D = x.shape
    H = wq.shape[1]
    Dp = _round_up(D, 128)     # lane-dense output / MXU-full input width
    Hp = _round_up(H, 128)     # lane-dense hidden width
    TQ = _choose_tq(T)
    NQ = T // TQ

    pad2 = lambda a, r, c: jnp.pad(a, ((0, r - a.shape[0]), (0, c - a.shape[1])))
    pad1 = lambda a, n: jnp.pad(a, (0, n - a.shape[0]))

    # bf16 MXU operands (f32 accumulation happens in-kernel).
    x_p = jnp.pad(x, ((0, 0), (0, 0), (0, Dp - D))).astype(jnp.bfloat16)
    w_qkv = jnp.concatenate(
        [pad2(wq, Dp, Hp), pad2(wk, Dp, Hp), pad2(wv, Dp, Hp)],
        axis=1).astype(jnp.bfloat16)                                          # (Dp, 3Hp)
    b_qkv = jnp.concatenate(
        [pad1(bq, Hp), pad1(bk, Hp), pad1(bv, Hp)]).reshape(1, 3 * Hp).astype(jnp.float32)
    wp_p = pad2(wp, Hp, Dp).astype(jnp.bfloat16)                              # (Hp, Dp)
    bp_p = pad1(bp, Dp).reshape(1, Dp).astype(jnp.float32)
    # Hoisted: exponentiate the positional bias once, outside the kernel.
    # Row-wise max subtraction cancels exactly in num/den (same row scale on both).
    wb = wbias[:T, :T].astype(jnp.float32)
    wb = wb - jnp.max(wb, axis=1, keepdims=True)
    exp_w = jnp.exp(wb).astype(jnp.bfloat16)                                  # (T, T)

    kernel = functools.partial(_aft_full_kernel, hp=Hp, tq_size=TQ)
    const2d = lambda shape: pl.BlockSpec(shape, lambda b, t: (0, 0))

    out_p = pl.pallas_call(
        kernel,
        out_shape=jax.ShapeDtypeStruct((B, T, Dp), x.dtype),
        grid_spec=pltpu.PrefetchScalarGridSpec(
            num_scalar_prefetch=0,
            grid=(B, NQ),
            in_specs=[
                pl.BlockSpec((1, T, Dp), lambda b, t: (b, 0, 0)),   # x (full seq, resident over tq)
                const2d((Dp, 3 * Hp)),                              # W_qkv
                const2d((1, 3 * Hp)),                               # b_qkv
                const2d((Hp, Dp)),                                  # W_proj
                const2d((1, Dp)),                                   # b_proj
                pl.BlockSpec((TQ, T), lambda b, t: (t, 0)),         # exp(wbias) query tile
            ],
            out_specs=pl.BlockSpec((1, TQ, Dp), lambda b, t: (b, t, 0)),
            scratch_shapes=[
                pltpu.VMEM((T, Hp), jnp.float32),        # sigmoid(Q), whole sequence
                pltpu.VMEM((T, 2 * Hp), jnp.bfloat16),   # [exp(K)*V | exp(K)]
            ],
        ),
        compiler_params=pltpu.CompilerParams(
            # Query axis carries the K/V scratch across tiles -> must be "arbitrary".
            dimension_semantics=("parallel", "arbitrary"),
            vmem_limit_bytes=_vmem_limit_bytes(),
        ),
    )(x_p, w_qkv, b_qkv, wp_p, bp_p, exp_w)

    return out_p[:, :, :D]


def init_params(key, max_seqlen, dim, hidden_dim):
    """Deterministic parameter init mirroring the module's __init__ shapes."""
    ks = jax.random.split(key, 9)

    def linear_init(kw, kb, fan_in, fan_out):
        # torch.nn.Linear default: U(-1/sqrt(fan_in), 1/sqrt(fan_in))
        bound = 1.0 / jnp.sqrt(fan_in)
        w = jax.random.uniform(kw, (fan_in, fan_out), jnp.float32, -bound, bound)
        b = jax.random.uniform(kb, (fan_out,), jnp.float32, -bound, bound)
        return w, b

    wq, bq = linear_init(ks[0], ks[1], dim, hidden_dim)
    wk, bk = linear_init(ks[2], ks[3], dim, hidden_dim)
    wv, bv = linear_init(ks[4], ks[5], dim, hidden_dim)
    wp, bp = linear_init(ks[6], ks[7], hidden_dim, dim)
    # xavier_uniform_ for wbias
    limit = jnp.sqrt(6.0 / (max_seqlen + max_seqlen))
    wbias = jax.random.uniform(ks[8], (max_seqlen, max_seqlen),
                               jnp.float32, -limit, limit)
    return wq, bq, wk, bk, wv, bv, wp, bp, wbias


def reference_forward(x, wq, bq, wk, bk, wv, bv, wp, bp, wbias):
    """Pure-JAX f32 reference of the PyTorch forward, for sanity checking."""
    B, T, _ = x.shape
    q = x @ wq + bq
    k = x @ wk + bk
    v = x @ wv + bv
    w = jnp.exp(wbias[:T, :T])[None]                       # (1, T, T)
    q_sig = jax.nn.sigmoid(q)
    num = jnp.einsum('btu,buh->bth', jnp.broadcast_to(w, (B, T, T)), jnp.exp(k) * v)
    den = jnp.einsum('btu,buh->bth', jnp.broadcast_to(w, (B, T, T)), jnp.exp(k))
    yt = q_sig * (num / den)
    return yt @ wp + bp


if __name__ == "__main__":
    B, T, D, H = 2, 8, 32, 64
    MAX_SEQLEN = 16

    key = jax.random.PRNGKey(0)
    kx, kp = jax.random.split(key)
    x = jax.random.normal(kx, (B, T, D), jnp.float32)
    params = init_params(kp, MAX_SEQLEN, D, H)

    out = jax.block_until_ready(aft_full_forward(x, *params))

    ref = reference_forward(x, *params)
    assert out.shape == (B, T, D)
    max_err = float(jnp.max(jnp.abs(out - ref)))
    # bf16 MXU operands + approx reciprocal -> looser tolerance vs f32 reference.
    assert jnp.allclose(out, ref, atol=5e-2, rtol=5e-2), max_err

    print("KERNEL_OK")
</pallas_src>

<mosaic_0001>
module attributes {stable_mosaic.version = 11 : i64} {
  func.func @_aft_full_kernel(%arg0: i32, %arg1: i32, %arg2: memref<1x8x128xbf16, #tpu.memory_space<vmem>>, %arg3: memref<128x384xbf16, #tpu.memory_space<vmem>>, %arg4: memref<1x384xf32, #tpu.memory_space<vmem>>, %arg5: memref<128x128xbf16, #tpu.memory_space<vmem>>, %arg6: memref<1x128xf32, #tpu.memory_space<vmem>>, %arg7: memref<8x8xbf16, #tpu.memory_space<vmem>>, %arg8: memref<1x8x128xf32, #tpu.memory_space<vmem>>, %arg9: memref<8x128xf32, #tpu.memory_space<vmem>>, %arg10: memref<8x256xbf16, #tpu.memory_space<vmem>>) attributes {dimension_semantics = [#tpu.dimension_semantics<parallel>, #tpu.dimension_semantics<arbitrary>], iteration_bounds = array<i64: 2, 1>, scalar_prefetch = 0 : i64, scratch_operands = 2 : i64, tpu.core_type = #tpu.core_type<tc>, window_params = [{transform_indices = @transform_0, window_bounds = array<i64: 1, 8, 128>}, {pipeline_mode = #tpu.pipeline_mode<synchronous>, transform_indices = @transform_1, window_bounds = array<i64: 128, 384>}, {pipeline_mode = #tpu.pipeline_mode<synchronous>, transform_indices = @transform_2, window_bounds = array<i64: 1, 384>}, {pipeline_mode = #tpu.pipeline_mode<synchronous>, transform_indices = @transform_3, window_bounds = array<i64: 128, 128>}, {pipeline_mode = #tpu.pipeline_mode<synchronous>, transform_indices = @transform_4, window_bounds = array<i64: 1, 128>}, {transform_indices = @transform_5, window_bounds = array<i64: 8, 8>}, {transform_indices = @transform_6, window_bounds = array<i64: 1, 8, 128>}]} {
    %c0_i32 = arith.constant 0 : i32
    %0 = arith.cmpi eq, %arg1, %c0_i32 : i32
    %1 = arith.extui %0 : i1 to i32
    %c0_i32_0 = arith.constant 0 : i32
    %2 = arith.cmpi ne, %1, %c0_i32_0 : i32
    scf.if %2 {
      %c0_13 = arith.constant 0 : index
      %c0_14 = arith.constant 0 : index
      %c0_15 = arith.constant 0 : index
      %24 = vector.load %arg2[%c0_13, %c0_14, %c0_15] : memref<1x8x128xbf16, #tpu.memory_space<vmem>>, vector<1x8x128xbf16>
      %25 = vector.shape_cast %24 : vector<1x8x128xbf16> to vector<8x128xbf16>
      %c0_16 = arith.constant 0 : index
      %c0_17 = arith.constant 0 : index
      %26 = vector.load %arg3[%c0_16, %c0_17] : memref<128x384xbf16, #tpu.memory_space<vmem>>, vector<128x384xbf16>
      %cst_18 = arith.constant dense<0.000000e+00> : vector<8x384xf32>
      %27 = tpu.matmul %25, %26, %cst_18 {dimension_numbers = #tpu.dot_dimension_numbers<[1], [0], [0], [1], [0, 0, 1, 1], [], []>} : vector<8x128xbf16>, vector<128x384xbf16>, vector<8x384xf32> -> vector<8x384xf32>
      %c0_19 = arith.constant 0 : index
      %c0_20 = arith.constant 0 : index
      %28 = vector.load %arg4[%c0_19, %c0_20] : memref<1x384xf32, #tpu.memory_space<vmem>>, vector<1x384xf32>
      %29 = vector.broadcast %28 : vector<1x384xf32> to vector<8x384xf32>
      %30 = arith.addf %27, %29 : vector<8x384xf32>
      %31 = vector.extract_strided_slice %30 {offsets = [0, 0], sizes = [8, 128], strides = [1, 1]} : vector<8x384xf32> to vector<8x128xf32>
      %32 = vector.extract_strided_slice %30 {offsets = [0, 128], sizes = [8, 128], strides = [1, 1]} : vector<8x384xf32> to vector<8x128xf32>
      %33 = vector.extract_strided_slice %30 {offsets = [0, 256], sizes = [8, 128], strides = [1, 1]} : vector<8x384xf32> to vector<8x128xf32>
      %34 = arith.negf %31 : vector<8x128xf32>
      %35 = math.exp %34 : vector<8x128xf32>
      %cst_21 = arith.constant 1.000000e+00 : f32
      %36 = vector.broadcast %cst_21 : f32 to vector<8x128xf32>
      %37 = arith.addf %36, %35 : vector<8x128xf32>
      %38 = arith.divf %36, %37 : vector<8x128xf32>
      %c0_22 = arith.constant 0 : index
      %c0_23 = arith.constant 0 : index
      %39 = vector.load %arg9[%c0_22, %c0_23] : memref<8x128xf32, #tpu.memory_space<vmem>>, vector<8x128xf32>
      tpu.vector_store %arg9[%c0_22, %c0_23], %38 {strides = array<i32>} : memref<8x128xf32, #tpu.memory_space<vmem>>, vector<8x128xf32>,
      %cst_24 = arith.constant dense<0xFF800000> : vector<128xf32>
      %40 = vector.multi_reduction <maximumf>, %32, %cst_24 [0] : vector<8x128xf32> to vector<128xf32>
      %41 = vector.shape_cast %40 : vector<128xf32> to vector<1x128xf32>
      %42 = vector.broadcast %41 : vector<1x128xf32> to vector<8x128xf32>
      %43 = arith.subf %32, %42 : vector<8x128xf32>
      %44 = math.exp %43 : vector<8x128xf32>
      %45 = arith.mulf %44, %33 : vector<8x128xf32>
      %46 = arith.truncf %45 : vector<8x128xf32> to vector<8x128xbf16>
      %c0_25 = arith.constant 0 : index
      %c0_26 = arith.constant 0 : index
      %47 = vector.load %arg10[%c0_25, %c0_26] : memref<8x256xbf16, #tpu.memory_space<vmem>>, vector<8x128xbf16>
      tpu.vector_store %arg10[%c0_25, %c0_26], %46 {strides = array<i32>} : memref<8x256xbf16, #tpu.memory_space<vmem>>, vector<8x128xbf16>,
      %48 = arith.truncf %44 : vector<8x128xf32> to vector<8x128xbf16>
      %c0_27 = arith.constant 0 : index
      %c128 = arith.constant 128 : index
      %49 = vector.load %arg10[%c0_27, %c128] : memref<8x256xbf16, #tpu.memory_space<vmem>>, vector<8x128xbf16>
      tpu.vector_store %arg10[%c0_27, %c128], %48 {strides = array<i32>} : memref<8x256xbf16, #tpu.memory_space<vmem>>, vector<8x128xbf16>,
    } else {
    }
    %c0 = arith.constant 0 : index
    %c0_1 = arith.constant 0 : index
    %3 = vector.load %arg7[%c0, %c0_1] : memref<8x8xbf16, #tpu.memory_space<vmem>>, vector<8x8xbf16>
    %c0_2 = arith.constant 0 : index
    %c0_3 = arith.constant 0 : index
    %4 = vector.load %arg10[%c0_2, %c0_3] : memref<8x256xbf16, #tpu.memory_space<vmem>>, vector<8x256xbf16>
    %cst = arith.constant dense<0.000000e+00> : vector<8x256xf32>
    %5 = tpu.matmul %3, %4, %cst {dimension_numbers = #tpu.dot_dimension_numbers<[1], [0], [0], [1], [0, 0, 1, 1], [], []>} : vector<8x8xbf16>, vector<8x256xbf16>, vector<8x256xf32> -> vector<8x256xf32>
    %6 = vector.extract_strided_slice %5 {offsets = [0, 0], sizes = [8, 128], strides = [1, 1]} : vector<8x256xf32> to vector<8x128xf32>
    %7 = vector.extract_strided_slice %5 {offsets = [0, 128], sizes = [8, 128], strides = [1, 1]} : vector<8x256xf32> to vector<8x128xf32>
    %c8_i32 = arith.constant 8 : i32
    %8 = arith.muli %arg1, %c8_i32 : i32
    %9 = tpu.assume_multiple %8, 8 : i32
    %10 = arith.index_cast %9 : i32 to index
    %c0_4 = arith.constant 0 : index
    %11 = vector.load %arg9[%10, %c0_4] : memref<8x128xf32, #tpu.memory_space<vmem>>, vector<8x128xf32>
    %12 = arith.mulf %11, %6 : vector<8x128xf32>
    %13 = tpu.reciprocal %7 {approx = true} : vector<8x128xf32> -> vector<8x128xf32>
    %14 = arith.mulf %12, %13 : vector<8x128xf32>
    %15 = arith.truncf %14 : vector<8x128xf32> to vector<8x128xbf16>
    %c0_5 = arith.constant 0 : index
    %c0_6 = arith.constant 0 : index
    %16 = vector.load %arg5[%c0_5, %c0_6] : memref<128x128xbf16, #tpu.memory_space<vmem>>, vector<128x128xbf16>
    %cst_7 = arith.constant dense<0.000000e+00> : vector<8x128xf32>
    %17 = tpu.matmul %15, %16, %cst_7 {dimension_numbers = #tpu.dot_dimension_numbers<[1], [0], [0], [1], [0, 0, 1, 1], [], []>} : vector<8x128xbf16>, vector<128x128xbf16>, vector<8x128xf32> -> vector<8x128xf32>
    %c0_8 = arith.constant 0 : index
    %c0_9 = arith.constant 0 : index
    %18 = vector.load %arg6[%c0_8, %c0_9] : memref<1x128xf32, #tpu.memory_space<vmem>>, vector<1x128xf32>
    %19 = vector.broadcast %18 : vector<1x128xf32> to vector<8x128xf32>
    %20 = arith.addf %17, %19 : vector<8x128xf32>
    %c0_10 = arith.constant 0 : index
    %c0_11 = arith.constant 0 : index
    %c0_12 = arith.constant 0 : index
    %21 = vector.load %arg8[%c0_10, %c0_11, %c0_12] : memref<1x8x128xf32, #tpu.memory_space<vmem>>, vector<1x8x128xf32>
    %22 = vector.shape_cast %21 : vector<1x8x128xf32> to vector<8x128xf32>
    %23 = vector.shape_cast %20 : vector<8x128xf32> to vector<1x8x128xf32>
    tpu.vector_store %arg8[%c0_10, %c0_11, %c0_12], %23 {strides = array<i32>} : memref<1x8x128xf32, #tpu.memory_space<vmem>>, vector<1x8x128xf32>,
    return
  }
  func.func @transform_0(%arg0: i32, %arg1: i32) -> (i32, i32, i32) {
    %c0_i32 = arith.constant 0 : i32
    %c0_i32_0 = arith.constant 0 : i32
    %c0_i32_1 = arith.constant 0 : i32
    return %arg0, %c0_i32, %c0_i32_0 : i32, i32, i32
  }
  func.func @transform_1(%arg0: i32, %arg1: i32) -> (i32, i32) {
    %c0_i32 = arith.constant 0 : i32
    %c0_i32_0 = arith.constant 0 : i32
    %c0_i32_1 = arith.constant 0 : i32
    return %c0_i32, %c0_i32_0 : i32, i32
  }
  func.func @transform_2(%arg0: i32, %arg1: i32) -> (i32, i32) {
    %c0_i32 = arith.constant 0 : i32
    %c0_i32_0 = arith.constant 0 : i32
    %c0_i32_1 = arith.constant 0 : i32
    return %c0_i32, %c0_i32_0 : i32, i32
  }
  func.func @transform_3(%arg0: i32, %arg1: i32) -> (i32, i32) {
    %c0_i32 = arith.constant 0 : i32
    %c0_i32_0 = arith.constant 0 : i32
    %c0_i32_1 = arith.constant 0 : i32
    return %c0_i32, %c0_i32_0 : i32, i32
  }
  func.func @transform_4(%arg0: i32, %arg1: i32) -> (i32, i32) {
    %c0_i32 = arith.constant 0 : i32
    %c0_i32_0 = arith.constant 0 : i32
    %c0_i32_1 = arith.constant 0 : i32
    return %c0_i32, %c0_i32_0 : i32, i32
  }
  func.func @transform_5(%arg0: i32, %arg1: i32) -> (i32, i32) {
    %c0_i32 = arith.constant 0 : i32
    %c0_i32_0 = arith.constant 0 : i32
    return %arg1, %c0_i32 : i32, i32
  }
  func.func @transform_6(%arg0: i32, %arg1: i32) -> (i32, i32, i32) {
    %c0_i32 = arith.constant 0 : i32
    %c0_i32_0 = arith.constant 0 : i32
    return %arg0, %arg1, %c0_i32 : i32, i32, i32
  }
}

</mosaic_0001>

<llo_original>
// kernel: aft_full_forward.1
$region0: #{aft_full_forward.1}
  #allocation0 [shape = 'u32[]', space=smem, size = 0x4, offset = 0x4, fixed_abs, tag = 'smem constant byte address 0x4 - core index']
  #allocation1 [shape = 'u32[144,128]{1,0:T(1,128)}', space=vmem, size = 0x12000, scoped, tag = 'internal scratch']
  #allocation2 [shape = 'f32[8,128]{1,0:T(8,128)}', space=vmem, size = 0x1000, scoped, tag = 'scratch operand']
  #allocation3 [shape = 'bf16[8,256]{1,0:T(8,128)(2,1)}', space=vmem, size = 0x1000, scoped, tag = 'scratch operand']
  %s0 = inlined_call_operand.hbm [shape: bf16[2,8,128], index: 0, kind: input, shape index: {}]
  %s1 = inlined_call_operand.hbm [shape: bf16[128,384], index: 1, kind: input, shape index: {}]
  %s2 = inlined_call_operand.hbm [shape: f32[1,384], index: 2, kind: input, shape index: {}]
  %s3 = inlined_call_operand.hbm [shape: bf16[128,128], index: 3, kind: input, shape index: {}]
  %s4 = inlined_call_operand.hbm [shape: f32[1,128], index: 4, kind: input, shape index: {}]
  %s5 = inlined_call_operand.hbm [shape: bf16[8,8], index: 5, kind: input, shape index: {}]
  %s6 = inlined_call_operand.hbm [shape: f32[2,8,128], index: 6, kind: output, shape index: {}]
  %s7 = sld [smem:[#allocation0]]
  $region85: #{aft_full_forward.1} parent=0
    _
  %s9 = ssub.s32 1, %s7
  %s10 = scalar_select 0, %s9, %s7
  $region1: #{aft_full_forward.1} parent=0
    #allocation4 [shape = 'u8[4096]{0}', space=vmem, size = 0x1000, scoped, tag = 'input window, operand 0']
    #allocation5 [shape = 's32[2]{0}', space=sflag, size = 0x8, scoped, tag = 'scoped memory for aft_full_forward.1']
    #allocation6 [shape = 's32[2]{0}', space=sflag, size = 0x8, scoped, tag = 'scoped memory for aft_full_forward.1']
    #allocation7 [shape = 'u8[98304]{0}', space=vmem, size = 0x18000, scoped, tag = 'input window, operand 1, single buffered']
    #allocation8 [shape = 's32[1]{0}', space=sflag, size = 0x4, scoped, tag = 'scoped memory for aft_full_forward.1']
    #allocation9 [shape = 'u8[1536]{0}', space=vmem, size = 0x800, scoped, tag = 'input window, operand 2, single buffered']
    #allocation10 [shape = 'u8[32768]{0}', space=vmem, size = 0x8000, scoped, tag = 'input window, operand 3, single buffered']
    #allocation11 [shape = 's32[1]{0}', space=sflag, size = 0x4, scoped, tag = 'scoped memory for aft_full_forward.1']
    #allocation12 [shape = 'u8[512]{0}', space=vmem, size = 0x400, scoped, tag = 'input window, operand 4, single buffered']
    #allocation13 [shape = 'u8[2048]{0}', space=vmem, size = 0x800, scoped, tag = 'input window, operand 5, single buffered']
    #allocation14 [shape = 's32[1]{0}', space=sflag, size = 0x4, scoped, tag = 'scoped memory for aft_full_forward.1']
    #allocation15 [shape = 'u8[8192]{0}', space=vmem, size = 0x2000, scoped, tag = 'output window, operand 0']
    %11 = vsyncpa [#allocation5], 0
    %s12 = scalar_lea.sflag [#allocation5], 1
    %13 = vsyncpa %s12, 0
    %14 = vsyncpa [#allocation8], 0
    %15 = vsyncpa [#allocation11], 0
    %16 = vsyncpa [#allocation14], 0
    %17 = vsyncpa [#allocation6], 0
    %s18 = scalar_lea.sflag [#allocation6], 1
    %19 = vsyncpa %s18, 0
    loop: start=0, step=1, limit=4
    $region2: #{aft_full_forward.1} parent=1 // loop_pre_header
      _
    $region3: #{aft_full_forward.1} parent=1 // loop_header
      %s21 = sphi 0, %s25
      %p22 = scmp.ge.s32.totalorder %s21, 4
      %s28 = sphi 0, %s40
      %s29 = sphi 0, %s36
      %s30 = sphi 0, %s28
      %s31 = sphi 0, %s29
      %s32 = sphi 0, %s30
      %s33 = sphi 0, %s31
      %s43 = sphi 0, %s45
      %s46 = sphi 0, %s43
      %s47 = sphi 0, %s46
      %s63 = sphi 0, %s47
      %s67 = sphi 0, %s67
      %s69 = sphi 0, %s67
      %s70 = sphi 0, %s69
      %s84 = sphi 0, %s70
      %s88 = sphi 0, %s88
      %s90 = sphi 0, %s88
      %s91 = sphi 0, %s90
      %s105 = sphi 0, %s91
      %s109 = sphi 0, %s109
      %s111 = sphi 0, %s109
      %s112 = sphi 0, %s111
      %s126 = sphi 0, %s112
      %s130 = sphi 0, %s130
      %s132 = sphi 0, %s130
      %s133 = sphi 0, %s132
      %s147 = sphi 0, %s133
      %s153 = sphi 0, %s155
      %s156 = sphi 0, %s153
      %s157 = sphi 0, %s156
      %s173 = sphi 0, %s157
      %s181 = sphi 0, %s183
      %s184 = sphi 0, %s181
      %s185 = sphi 0, %s184
      %s201 = sphi 0, %s185
    $region4: #{aft_full_forward.1} parent=1 // loop_header_branch
      %24 = sbr.rel (%p22) target = $region8
    $region5: #{aft_full_forward.1} parent=1 // loop_body
      %s26 = ssub.s32 %s21, 1
      %s27 = ssub.s32 %s21, 2
      %s34 = sadd.s32 1, %s29
      %p35 = scmp.ge.s32.totalorder %s34, 1
      %s36 = scalar_select %p35, 0, %s34
      %s37 = sadd.s32 1, %s28
      %s38 = scalar_select %p35, %s37, %s28
      %p39 = scmp.ge.s32.totalorder %s38, 2
      %s40 = scalar_select %p39, 0, %s38
      %s41 = ssub.s32 %s28, %s40
      %p42 = scmp.eq.s32.totalorder %s41, 0
      %s44 = sadd.s32 %s43, 1
      %s45 = scalar_select %p42, %s43, %s44
      %p48 = pneg %p42
      %p49 = scmp.eq.s32.totalorder %s21, 1
      %p50 = por %p48, %p49
      %p51 = scmp.ne.s32.totalorder %s43, %s46
      %p52 = scmp.eq.s32.totalorder %s21, 0
      %p53 = por %p51, %p52
      %p54 = scmp.ne.s32.totalorder %s43, %s46
      %p55 = scmp.eq.s32.totalorder %s26, 1
      %p56 = por %p54, %p55
      %p57 = scmp.ne.s32.totalorder %s46, %s47
      %p58 = scmp.eq.s32.totalorder %s26, 0
      %p59 = por %p57, %p58
      %p60 = scmp.ne.s32.totalorder %s46, %s47
      %p61 = scmp.eq.s32.totalorder %s27, 1
      %p62 = por %p60, %p61
      %p64 = scmp.ne.s32.totalorder %s47, %s63
      %p65 = scmp.eq.s32.totalorder %s27, 0
      %p66 = por %p64, %p65
      %s68 = sadd.s32 %s67, 1
      %p71 = scmp.eq.s32.totalorder %s21, 1
      %p72 = scmp.ne.s32.totalorder %s67, %s69
      %p73 = scmp.eq.s32.totalorder %s21, 0
      %p74 = por %p72, %p73
      %p75 = scmp.ne.s32.totalorder %s67, %s69
      %p76 = scmp.eq.s32.totalorder %s26, 1
      %p77 = por %p75, %p76
      %p78 = scmp.ne.s32.totalorder %s69, %s70
      %p79 = scmp.eq.s32.totalorder %s26, 0
      %p80 = por %p78, %p79
      %p81 = scmp.ne.s32.totalorder %s69, %s70
      %p82 = scmp.eq.s32.totalorder %s27, 1
      %p83 = por %p81, %p82
      %p85 = scmp.ne.s32.totalorder %s70, %s84
      %p86 = scmp.eq.s32.totalorder %s27, 0
      %p87 = por %p85, %p86
      %s89 = sadd.s32 %s88, 1
      %p92 = scmp.eq.s32.totalorder %s21, 1
      %p93 = scmp.ne.s32.totalorder %s88, %s90
      %p94 = scmp.eq.s32.totalorder %s21, 0
      %p95 = por %p93, %p94
      %p96 = scmp.ne.s32.totalorder %s88, %s90
      %p97 = scmp.eq.s32.totalorder %s26, 1
      %p98 = por %p96, %p97
      %p99 = scmp.ne.s32.totalorder %s90, %s91
      %p100 = scmp.eq.s32.totalorder %s26, 0
      %p101 = por %p99, %p100
      %p102 = scmp.ne.s32.totalorder %s90, %s91
      %p103 = scmp.eq.s32.totalorder %s27, 1
      %p104 = por %p102, %p103
      %p106 = scmp.ne.s32.totalorder %s91, %s105
      %p107 = scmp.eq.s32.totalorder %s27, 0
      %p108 = por %p106, %p107
      %s110 = sadd.s32 %s109, 1
      %p113 = scmp.eq.s32.totalorder %s21, 1
      %p114 = scmp.ne.s32.totalorder %s109, %s111
      %p115 = scmp.eq.s32.totalorder %s21, 0
      %p116 = por %p114, %p115
      %p117 = scmp.ne.s32.totalorder %s109, %s111
      %p118 = scmp.eq.s32.totalorder %s26, 1
      %p119 = por %p117, %p118
      %p120 = scmp.ne.s32.totalorder %s111, %s112
      %p121 = scmp.eq.s32.totalorder %s26, 0
      %p122 = por %p120, %p121
      %p123 = scmp.ne.s32.totalorder %s111, %s112
      %p124 = scmp.eq.s32.totalorder %s27, 1
      %p125 = por %p123, %p124
      %p127 = scmp.ne.s32.totalorder %s112, %s126
      %p128 = scmp.eq.s32.totalorder %s27, 0
      %p129 = por %p127, %p128
      %s131 = sadd.s32 %s130, 1
      %p134 = scmp.eq.s32.totalorder %s21, 1
      %p135 = scmp.ne.s32.totalorder %s130, %s132
      %p136 = scmp.eq.s32.totalorder %s21, 0
      %p137 = por %p135, %p136
      %p138 = scmp.ne.s32.totalorder %s130, %s132
      %p139 = scmp.eq.s32.totalorder %s26, 1
      %p140 = por %p138, %p139
      %p141 = scmp.ne.s32.totalorder %s132, %s133
      %p142 = scmp.eq.s32.totalorder %s26, 0
      %p143 = por %p141, %p142
      %p144 = scmp.ne.s32.totalorder %s132, %s133
      %p145 = scmp.eq.s32.totalorder %s27, 1
      %p146 = por %p144, %p145
      %p148 = scmp.ne.s32.totalorder %s133, %s147
      %p149 = scmp.eq.s32.totalorder %s27, 0
      %p150 = por %p148, %p149
      %s151 = ssub.s32 %s29, %s36
      %p152 = scmp.eq.s32.totalorder %s151, 0
      %s154 = sadd.s32 %s153, 1
      %s155 = scalar_select %p152, %s153, %s154
      %p158 = pneg %p152
      %p159 = scmp.eq.s32.totalorder %s21, 1
      %p160 = por %p158, %p159
      %p161 = scmp.ne.s32.totalorder %s153, %s156
      %p162 = scmp.eq.s32.totalorder %s21, 0
      %p163 = por %p161, %p162
      %p164 = scmp.ne.s32.totalorder %s153, %s156
      %p165 = scmp.eq.s32.totalorder %s26, 1
      %p166 = por %p164, %p165
      %p167 = scmp.ne.s32.totalorder %s156, %s157
      %p168 = scmp.eq.s32.totalorder %s26, 0
      %p169 = por %p167, %p168
      %p170 = scmp.ne.s32.totalorder %s156, %s157
      %p171 = scmp.eq.s32.totalorder %s27, 1
      %p172 = por %p170, %p171
      %p174 = scmp.ne.s32.totalorder %s157, %s173
      %p175 = scmp.eq.s32.totalorder %s27, 0
      %p176 = por %p174, %p175
      %s177 = ssub.s32 %s28, %s40
      %s178 = ssub.s32 %s29, %s36
      %s179 = sor.u32 %s177, %s178
      %p180 = scmp.eq.s32.totalorder %s179, 0
      %s182 = sadd.s32 %s181, 1
      %s183 = scalar_select %p180, %s181, %s182
      %p186 = pneg %p180
      %p187 = scmp.eq.s32.totalorder %s21, 1
      %p188 = por %p186, %p187
      %p189 = scmp.ne.s32.totalorder %s181, %s184
      %p190 = scmp.eq.s32.totalorder %s21, 0
      %p191 = por %p189, %p190
      %p192 = scmp.ne.s32.totalorder %s181, %s184
      %p193 = scmp.eq.s32.totalorder %s26, 1
      %p194 = por %p192, %p193
      %p195 = scmp.ne.s32.totalorder %s184, %s185
      %p196 = scmp.eq.s32.totalorder %s26, 0
      %p197 = por %p195, %p196
      %p198 = scmp.ne.s32.totalorder %s184, %s185
      %p199 = scmp.eq.s32.totalorder %s27, 1
      %p200 = por %p198, %p199
      %p202 = scmp.ne.s32.totalorder %s185, %s201
      %p203 = scmp.eq.s32.totalorder %s27, 0
      %p204 = por %p202, %p203
      %p205 = scmp.le.s32.totalorder 1, %s21
      %p206 = scmp.lt.s32.totalorder %s21, 3
      %p207 = pnand %p205, %p206
      %p208 = pneg %p207
      // Predicated region
      $region9: #{aft_full_forward.1} parent=5 // pred_check
        _
      $region10: #{aft_full_forward.1} parent=5 // pred_check_branch
        %210 = sbr.rel (%p207) target = $region12
      $region11: #{aft_full_forward.1} parent=5 // pred_region
        %s211 = ssub.s32 %s21, 1
        // Predicated region
        $region13: #{aft_full_forward.1} parent=11 // pred_check
          %p212 = pneg %p80
        $region14: #{aft_full_forward.1} parent=11 // pred_check_branch
          %214 = sbr.rel (%p212) target = $region16
        $region15: #{aft_full_forward.1} parent=11 // pred_region
          %s216 = ssub.s32 3072, 3072
          %217 = vsyncadd [#allocation8], %s216
          %s218 = sshll.u32 [#allocation7], 4
          %s219 = int_to_ptr.vmem [resolvable:$true] %s218
          %224 = dma.hbm_to_vmem [thread:$0]  %s1, 3072, %s219, [#allocation8], 192, 192, 12
        $region16: #{aft_full_forward.1} parent=11 // pred_fallthru
          _
        // Predicated region
        $region17: #{aft_full_forward.1} parent=11 // pred_check
          %p225 = pneg %p101
        $region18: #{aft_full_forward.1} parent=11 // pred_check_branch
          %227 = sbr.rel (%p225) target = $region20
        $region19: #{aft_full_forward.1} parent=11 // pred_region
          %s229 = ssub.s32 48, 48
          %230 = vsyncadd [#allocation8], %s229
          %s232 = sshll.u32 [#allocation9], 4
          %s233 = int_to_ptr.vmem [resolvable:$true] %s232
          %235 = dma.hbm_to_vmem [thread:$0]  %s2, 48, %s233, [#allocation8]
        $region20: #{aft_full_forward.1} parent=11 // pred_fallthru
          _
        // Predicated region
        $region21: #{aft_full_forward.1} parent=11 // pred_check
          %p236 = pneg %p122
        $region22: #{aft_full_forward.1} parent=11 // pred_check_branch
          %238 = sbr.rel (%p236) target = $region24
        $region23: #{aft_full_forward.1} parent=11 // pred_region
          %s240 = ssub.s32 1024, 1024
          %241 = vsyncadd [#allocation11], %s240
          %s242 = sshll.u32 [#allocation10], 4
          %s243 = int_to_ptr.vmem [resolvable:$true] %s242
          %248 = dma.hbm_to_vmem [thread:$0]  %s3, 1024, %s243, [#allocation11], 64, 64, 4
        $region24: #{aft_full_forward.1} parent=11 // pred_fallthru
          _
        // Predicated region
        $region25: #{aft_full_forward.1} parent=11 // pred_check
          %p249 = pneg %p143
        $region26: #{aft_full_forward.1} parent=11 // pred_check_branch
          %251 = sbr.rel (%p249) target = $region28
        $region27: #{aft_full_forward.1} parent=11 // pred_region
          %s253 = ssub.s32 16, 16
          %254 = vsyncadd [#allocation11], %s253
          %s256 = sshll.u32 [#allocation12], 4
          %s257 = int_to_ptr.vmem [resolvable:$true] %s256
          %259 = dma.hbm_to_vmem [thread:$0]  %s4, 16, %s257, [#allocation11]
        $region28: #{aft_full_forward.1} parent=11 // pred_fallthru
          _
        // Predicated region
        $region29: #{aft_full_forward.1} parent=11 // pred_check
          %p260 = pneg %p169
        $region30: #{aft_full_forward.1} parent=11 // pred_check_branch
          %262 = sbr.rel (%p260) target = $region32
        $region31: #{aft_full_forward.1} parent=11 // pred_region
          %s264 = ssub.s32 64, 64
          %265 = vsyncadd [#allocation14], %s264
          %s266 = smul.addr %s31, 64
          %s267 = scalar_lea.hbm %s5, %s266
          %s269 = sshll.u32 [#allocation13], 4
          %s270 = int_to_ptr.vmem [resolvable:$true] %s269
          %272 = dma.hbm_to_vmem [thread:$0]  %s267, 64, %s270, [#allocation14]
        $region32: #{aft_full_forward.1} parent=11 // pred_fallthru
          _
      $region12: #{aft_full_forward.1} parent=5 // pred_fallthru
        _
      %p273 = scmp.lt.s32.totalorder %s21, 2
      // Predicated region
      $region33: #{aft_full_forward.1} parent=5 // pred_check
        %p274 = pneg %p273
      $region34: #{aft_full_forward.1} parent=5 // pred_check_branch
        %276 = sbr.rel (%p274) target = $region36
      $region35: #{aft_full_forward.1} parent=5 // pred_region
        // Predicated region
        $region37: #{aft_full_forward.1} parent=35 // pred_check
          %p277 = pneg %p53
        $region38: #{aft_full_forward.1} parent=35 // pred_check_branch
          %279 = sbr.rel (%p277) target = $region40
        $region39: #{aft_full_forward.1} parent=35 // pred_region
          %s280 = sand.u32 %s43, 1
          %s281 = scalar_lea.sflag [#allocation5], %s280
          %s282 = sand.u32 %s43, 1
          %s283 = smul.addr %s282, 4
          %s284 = scalar_lea.vmem [#allocation4], %s283
          %s286 = ssub.s32 64, 64
          %287 = vsyncadd %s281, %s286
          %s288 = smul.addr %s28, 64
          %s289 = scalar_lea.hbm %s0, %s288
          %s291 = sshll.u32 %s284, 4
          %s292 = int_to_ptr.vmem [resolvable:$true] %s291
          %294 = dma.hbm_to_vmem [thread:$0]  %s289, 64, %s292, %s281
        $region40: #{aft_full_forward.1} parent=35 // pred_fallthru
          _
      $region36: #{aft_full_forward.1} parent=5 // pred_fallthru
        _
      %p295 = scmp.le.s32.totalorder 1, %s21
      %p296 = scmp.lt.s32.totalorder %s21, 3
      %p297 = pnand %p295, %p296
      %p298 = pneg %p297
      // Predicated region
      $region41: #{aft_full_forward.1} parent=5 // pred_check
        _
      $region42: #{aft_full_forward.1} parent=5 // pred_check_branch
        %300 = sbr.rel (%p297) target = $region44
      $region43: #{aft_full_forward.1} parent=5 // pred_region
        %s301 = ssub.s32 %s21, 1
        %s302 = sand.u32 %s46, 1
        %s303 = scalar_lea.sflag [#allocation5], %s302
        %s304 = sand.u32 %s46, 1
        %s305 = smul.addr %s304, 4
        %s306 = scalar_lea.vmem [#allocation4], %s305
        // Predicated region
        $region45: #{aft_full_forward.1} parent=43 // pred_check
          %p307 = pneg %p59
        $region46: #{aft_full_forward.1} parent=43 // pred_check_branch
          %309 = sbr.rel (%p307) target = $region48
        $region47: #{aft_full_forward.1} parent=43 // pred_region
          %310 = dma.done %s303, 64
        $region48: #{aft_full_forward.1} parent=43 // pred_fallthru
          _
        // Predicated region
        $region49: #{aft_full_forward.1} parent=43 // pred_check
          %p311 = pneg %p80
        $region50: #{aft_full_forward.1} parent=43 // pred_check_branch
          %313 = sbr.rel (%p311) target = $region52
        $region51: #{aft_full_forward.1} parent=43 // pred_region
          %314 = dma.done [#allocation8], 3072
        $region52: #{aft_full_forward.1} parent=43 // pred_fallthru
          _
        // Predicated region
        $region53: #{aft_full_forward.1} parent=43 // pred_check
          %p315 = pneg %p101
        $region54: #{aft_full_forward.1} parent=43 // pred_check_branch
          %317 = sbr.rel (%p315) target = $region56
        $region55: #{aft_full_forward.1} parent=43 // pred_region
          %318 = dma.done [#allocation8], 48
        $region56: #{aft_full_forward.1} parent=43 // pred_fallthru
          _
        // Predicated region
        $region57: #{aft_full_forward.1} parent=43 // pred_check
          %p319 = pneg %p122
        $region58: #{aft_full_forward.1} parent=43 // pred_check_branch
          %321 = sbr.rel (%p319) target = $region60
        $region59: #{aft_full_forward.1} parent=43 // pred_region
          %322 = dma.done [#allocation11], 1024
        $region60: #{aft_full_forward.1} parent=43 // pred_fallthru
          _
        // Predicated region
        $region61: #{aft_full_forward.1} parent=43 // pred_check
          %p323 = pneg %p143
        $region62: #{aft_full_forward.1} parent=43 // pred_check_branch
          %325 = sbr.rel (%p323) target = $region64
        $region63: #{aft_full_forward.1} parent=43 // pred_region
          %326 = dma.done [#allocation11], 16
        $region64: #{aft_full_forward.1} parent=43 // pred_fallthru
          _
        // Predicated region
        $region65: #{aft_full_forward.1} parent=43 // pred_check
          %p327 = pneg %p169
        $region66: #{aft_full_forward.1} parent=43 // pred_check_branch
          %329 = sbr.rel (%p327) target = $region68
        $region67: #{aft_full_forward.1} parent=43 // pred_region
          %330 = dma.done [#allocation14], 64
        $region68: #{aft_full_forward.1} parent=43 // pred_fallthru
          _
        %s331 = sand.u32 %s46, 1
        %s332 = scalar_lea.sflag [#allocation5], %s331
        %s333 = sand.u32 %s46, 1
        %s334 = smul.addr %s333, 4
        %s335 = scalar_lea.vmem [#allocation4], %s334
        %p336 = pneg %p59
        %p337 = pneg %p56
        %p338 = pneg %p80
        %p339 = pneg %p77
        %p340 = pneg %p101
        %p341 = pneg %p98
        %p342 = pneg %p122
        %p343 = pneg %p119
        %p344 = pneg %p143
        %p345 = pneg %p140
        %p346 = pneg %p169
        %p347 = pneg %p166
        %p348 = pneg %p197
        %p349 = pneg %p194
        %s350 = sand.u32 %s184, 1
        %s351 = scalar_lea.sflag [#allocation6], %s350
        %s352 = sand.u32 %s184, 1
        %s353 = smul.addr %s352, 8
        %s354 = scalar_lea.vmem [#allocation15], %s353
        %p356 = scmp.eq.s32.totalorder %s31, 0
        // Predicated region
        $region69: #{aft_full_forward.1} parent=43 // pred_check
          %p357 = pneg %p356
        $region70: #{aft_full_forward.1} parent=43 // pred_check_branch
          %359 = sbr.rel (%p357) target = $region72
        $region71: #{aft_full_forward.1} parent=43 // pred_region
          %v360 = vld [vmem:[%s306] sm:$0xf]
          %v361 = vld [vmem:[#allocation7] sm:$0xff]
          %v362 = vld [vmem:[#allocation7 + $0x8] sm:$0xf]
          %v363 = vld [vmem:[#allocation7 + $0xc] sm:$0xff]
          %v364 = vld [vmem:[#allocation7 + $0x14] sm:$0xf]
          %v365 = vld [vmem:[#allocation7 + $0x18] sm:$0xff]
          %v366 = vld [vmem:[#allocation7 + $0x20] sm:$0xf]
          %v367 = vld [vmem:[#allocation7 + $0x24] sm:$0xff]
          %v368 = vld [vmem:[#allocation7 + $0x2c] sm:$0xf]
          %v369 = vld [vmem:[#allocation7 + $0x30] sm:$0xff]
          %v370 = vld [vmem:[#allocation7 + $0x38] sm:$0xf]
          %v371 = vld [vmem:[#allocation7 + $0x3c] sm:$0xff]
          %v372 = vld [vmem:[#allocation7 + $0x44] sm:$0xf]
          %v373 = vld [vmem:[#allocation7 + $0x48] sm:$0xff]
          %v374 = vld [vmem:[#allocation7 + $0x50] sm:$0xf]
          %v375 = vld [vmem:[#allocation7 + $0x54] sm:$0xff]
          %v376 = vld [vmem:[#allocation7 + $0x5c] sm:$0xf]
          %v377 = vld [vmem:[#allocation7 + $0x60] sm:$0xff]
          %v378 = vld [vmem:[#allocation7 + $0x68] sm:$0xf]
          %v379 = vld [vmem:[#allocation7 + $0x6c] sm:$0xff]
          %v380 = vld [vmem:[#allocation7 + $0x74] sm:$0xf]
          %v381 = vld [vmem:[#allocation7 + $0x78] sm:$0xff]
          %v382 = vld [vmem:[#allocation7 + $0x80] sm:$0xf]
          %v383 = vld [vmem:[#allocation7 + $0x84] sm:$0xff]
          %v384 = vld [vmem:[#allocation7 + $0x8c] sm:$0xf]
          %v385 = vld [vmem:[#allocation7 + $0x90] sm:$0xff]
          %v386 = vld [vmem:[#allocation7 + $0x98] sm:$0xf]
          %v387 = vld [vmem:[#allocation7 + $0x9c] sm:$0xff]
          %v388 = vld [vmem:[#allocation7 + $0xa4] sm:$0xf]
          %v389 = vld [vmem:[#allocation7 + $0xa8] sm:$0xff]
          %v390 = vld [vmem:[#allocation7 + $0xb0] sm:$0xf]
          %v391 = vld [vmem:[#allocation7 + $0xb4] sm:$0xff]
          %v392 = vld [vmem:[#allocation7 + $0xbc] sm:$0xf]
          %v393 = vld [vmem:[#allocation9] sm:$0x7]
          %v395 = vlaneseq
          %v396 = vshrl.u32 %v395, 7
          %v397 = vsub.s32 0, %v396
          %v398 = vrot.slane %v393, %v397
          %v399 = vlaneseq
          %v400 = vshrl.u32 %v399, 7
          %v401 = vsub.s32 1, %v400
          %v402 = vrot.slane %v393, %v401
          %v403 = vlaneseq
          %v404 = vshrl.u32 %v403, 7
          %v405 = vsub.s32 2, %v404
          %v406 = vrot.slane %v393, %v405
          %v442 = vunpack.c.l.b16 %v361
          %v443 = vunpack.c.h.b16 %v361
          %v444 = vunpack.c.l.b16 %v362
          %v445 = vunpack.c.l.b16 %v363
          %v446 = vunpack.c.h.b16 %v363
          %v447 = vunpack.c.l.b16 %v364
          %v448 = vunpack.c.l.b16 %v365
          %v449 = vunpack.c.h.b16 %v365
          %v450 = vunpack.c.l.b16 %v366
          %v451 = vunpack.c.l.b16 %v367
          %v452 = vunpack.c.h.b16 %v367
          %v453 = vunpack.c.l.b16 %v368
          %v454 = vunpack.c.l.b16 %v369
          %v455 = vunpack.c.h.b16 %v369
          %v456 = vunpack.c.l.b16 %v370
          %v457 = vunpack.c.l.b16 %v371
          %v458 = vunpack.c.h.b16 %v371
          %v459 = vunpack.c.l.b16 %v372
          %v460 = vunpack.c.l.b16 %v373
          %v461 = vunpack.c.h.b16 %v373
          %v462 = vunpack.c.l.b16 %v374
          %v463 = vunpack.c.l.b16 %v375
          %v464 = vunpack.c.h.b16 %v375
          %v465 = vunpack.c.l.b16 %v376
          %v466 = vunpack.c.l.b16 %v377
          %v467 = vunpack.c.h.b16 %v377
          %v468 = vunpack.c.l.b16 %v378
          %v469 = vunpack.c.l.b16 %v379
          %v470 = vunpack.c.h.b16 %v379
          %v471 = vunpack.c.l.b16 %v380
          %v472 = vunpack.c.l.b16 %v381
          %v473 = vunpack.c.h.b16 %v381
          %v474 = vunpack.c.l.b16 %v382
          %v475 = vunpack.c.l.b16 %v383
          %v476 = vunpack.c.h.b16 %v383
          %v477 = vunpack.c.l.b16 %v384
          %v478 = vunpack.c.l.b16 %v385
          %v479 = vunpack.c.h.b16 %v385
          %v480 = vunpack.c.l.b16 %v386
          %v481 = vunpack.c.l.b16 %v387
          %v482 = vunpack.c.h.b16 %v387
          %v483 = vunpack.c.l.b16 %v388
          %v484 = vunpack.c.l.b16 %v389
          %v485 = vunpack.c.h.b16 %v389
          %v486 = vunpack.c.l.b16 %v390
          %v487 = vunpack.c.l.b16 %v391
          %v488 = vunpack.c.h.b16 %v391
          %v489 = vunpack.c.l.b16 %v392
          %v490 = vpack.c.b16 %v445, %v442
          %v491 = vpack.c.b16 %v446, %v443
          %v492 = vpack.c.b16 %v447, %v444
          %v493 = vpack.c.b16 %v451, %v448
          %v494 = vpack.c.b16 %v452, %v449
          %v495 = vpack.c.b16 %v453, %v450
          %v496 = vpack.c.b16 %v457, %v454
          %v497 = vpack.c.b16 %v458, %v455
          %v498 = vpack.c.b16 %v459, %v456
          %v499 = vpack.c.b16 %v463, %v460
          %v500 = vpack.c.b16 %v464, %v461
          %v501 = vpack.c.b16 %v465, %v462
          %v502 = vpack.c.b16 %v469, %v466
          %v503 = vpack.c.b16 %v470, %v467
          %v504 = vpack.c.b16 %v471, %v468
          %v505 = vpack.c.b16 %v475, %v472
          %v506 = vpack.c.b16 %v476, %v473
          %v507 = vpack.c.b16 %v477, %v474
          %v508 = vpack.c.b16 %v481, %v478
          %v509 = vpack.c.b16 %v482, %v479
          %v510 = vpack.c.b16 %v483, %v480
          %v511 = vpack.c.b16 %v487, %v484
          %v512 = vpack.c.b16 %v488, %v485
          %v513 = vpack.c.b16 %v489, %v486
          %538 = vmatprep.subr.bf16.mxu0 %v491
          %539 = vmatpush1.bf16.msra.mxu0 %v490
          %540 = vmatprep.subr.bf16.mxu0 %v494
          %541 = vmatpush1.bf16.msra.mxu0 %v493
          %542 = vmatprep.subr.bf16.mxu0 %v497
          %543 = vmatpush1.bf16.msra.mxu0 %v496
          %544 = vmatprep.subr.bf16.mxu0 %v500
          %545 = vmatpush1.bf16.msra.mxu0 %v499
          %546 = vmatprep.subr.bf16.mxu0 %v503
          %547 = vmatpush1.bf16.msra.mxu0 %v502
          %548 = vmatprep.subr.bf16.mxu0 %v506
          %549 = vmatpush1.bf16.msra.mxu0 %v505
          %550 = vmatprep.subr.bf16.mxu0 %v509
          %551 = vmatpush1.bf16.msra.mxu0 %v508
          %552 = vmatprep.subr.bf16.mxu0 %v512
          %553 = vmatpush1.bf16.msra.mxu0 %v511
          %554 = vmatprep.subr.bf16.mxu0 0
          %555 = vmatpush1.bf16.msra.mxu0 0
          %556 = vmatprep.subr.bf16.mxu0 0
          %557 = vmatpush1.bf16.msra.mxu0 0
          %558 = vmatprep.subr.bf16.mxu0 0
          %559 = vmatpush1.bf16.msra.mxu0 0
          %560 = vmatprep.subr.bf16.mxu0 0
          %561 = vmatpush1.bf16.msra.mxu0 0
          %562 = vmatprep.subr.bf16.mxu0 0
          %563 = vmatpush1.bf16.msra.mxu0 0
          %564 = vmatprep.subr.bf16.mxu0 0
          %565 = vmatpush1.bf16.msra.mxu0 0
          %566 = vmatprep.subr.bf16.mxu0 0
          %567 = vmatpush1.bf16.msra.mxu0 0
          %568 = vmatprep.subr.bf16.mxu0 0
          %569 = vmatpush1.bf16.msra.mxu0 0
          %570 = vmatprep.mubr.bf16.mxu0 0
          %571 = vmatmul.mubr.bf16.gmra.mrb[0].mxu0 %v360
          %v572 = vpop.f32.mrb[0].mxu0
          %v573 = vadd.f32 %v398, %v572
          %v574 = vpop.f32.mrb[0].mxu0
          %v575 = vadd.f32 %v402, %v574
          %v576 = vpop.f32.mrb[0].mxu0
          %v577 = vpop.f32.mrb[0].mxu0
          %578 = vdwg.mxu0
          %579 = vmatprep.subr.bf16.mxu0 0
          %580 = vmatpush1.bf16.msra.mxu0 %v492
          %581 = vmatprep.subr.bf16.mxu0 0
          %582 = vmatpush1.bf16.msra.mxu0 %v495
          %583 = vmatprep.subr.bf16.mxu0 0
          %584 = vmatpush1.bf16.msra.mxu0 %v498
          %585 = vmatprep.subr.bf16.mxu0 0
          %586 = vmatpush1.bf16.msra.mxu0 %v501
          %587 = vmatprep.subr.bf16.mxu0 0
          %588 = vmatpush1.bf16.msra.mxu0 %v504
          %589 = vmatprep.subr.bf16.mxu0 0
          %590 = vmatpush1.bf16.msra.mxu0 %v507
          %591 = vmatprep.subr.bf16.mxu0 0
          %592 = vmatpush1.bf16.msra.mxu0 %v510
          %593 = vmatprep.subr.bf16.mxu0 0
          %594 = vmatpush1.bf16.msra.mxu0 %v513
          %595 = vmatprep.subr.bf16.mxu0 0
          %596 = vmatpush1.bf16.msra.mxu0 0
          %597 = vmatprep.subr.bf16.mxu0 0
          %598 = vmatpush1.bf16.msra.mxu0 0
          %599 = vmatprep.subr.bf16.mxu0 0
          %600 = vmatpush1.bf16.msra.mxu0 0
          %601 = vmatprep.subr.bf16.mxu0 0
          %602 = vmatpush1.bf16.msra.mxu0 0
          %603 = vmatprep.subr.bf16.mxu0 0
          %604 = vmatpush1.bf16.msra.mxu0 0
          %605 = vmatprep.subr.bf16.mxu0 0
          %606 = vmatpush1.bf16.msra.mxu0 0
          %607 = vmatprep.subr.bf16.mxu0 0
          %608 = vmatpush1.bf16.msra.mxu0 0
          %609 = vmatprep.subr.bf16.mxu0 0
          %610 = vmatpush1.bf16.msra.mxu0 0
          %611 = vmatprep.mubr.bf16.mxu0 0
          %612 = vmatmul.mubr.bf16.gmra.mrb[0].mxu0 %v360
          %v613 = vpop.f32.mrb[0].mxu0
          %v614 = vadd.f32 %v406, %v613
          %v615 = vpop.f32.mrb[0].mxu0
          %v616 = vpop.f32.mrb[0].mxu0
          %v617 = vpop.f32.mrb[0].mxu0
          %618 = vdwg.mxu0
          %v619 = vxor.u32 %v573, 2147483648
          %v620 = vmul.f32 %v619, 1.442695
          %v621 = vpow.pop %v620
          %v622 = vadd.f32 %v621, 1.0
          %v623 = vrcp.pop %v622
          %v624 = vmul.f32 1.0, %v623
          %625 = vst [vmem:[#allocation2] sm:$0xff] %v624
          %v626 = vrot.slane %v575, 4
          %v627 = vmax.f32 %v575, %v626
          %v628 = vrot.slane %v627, 2
          %v629 = vmax.f32 %v627, %v628
          %v630 = vrot.slane %v629, 1
          %v631 = vmax.f32 %v629, %v630
          %v632 = vsub.f32 %v575, %v631
          %v633 = vmul.f32 %v632, 1.442695
          %v634 = vpow.pop %v633
          %v635 = vmul.f32 %v634, %v614
          %v636 = vpack.c.bf16 %v635, %v635
          %637 = vst [vmem:[#allocation3] sm:$0xf] %v636
          %v638 = vpack.c.bf16 %v634, %v634
          %639 = vst [vmem:[#allocation3 + $0x4] sm:$0xf] %v638
        $region72: #{aft_full_forward.1} parent=43 // pred_fallthru
          _
        %v640 = vld [vmem:[#allocation13] sm:$0xf]
        %v641 = vld [vmem:[#allocation3] sm:$0xff]
        %v643 = vunpack.c.l.b16 %v641
        %v644 = vunpack.c.h.b16 %v641
        %v645 = vpack.c.b16 %v643, %v643
        %v646 = vpack.c.b16 %v644, %v644
        %vm647 = vcmask 64512
        %v649 = vsel %vm647, %v640, 0
        %vm651 = vcmask 1043456
        %v653 = vsel %vm651, %v645, 0
        %v656 = vsel %vm651, %v646, 0
        %658 = vmatprep.subr.bf16.mxu0 %v656
        %659 = vmatpush1.bf16.msra.mxu0 %v653
        %660 = vmatprep.subr.bf16.mxu0 0
        %661 = vmatpush1.bf16.msra.mxu0 0
        %662 = vmatprep.subr.bf16.mxu0 0
        %663 = vmatpush1.bf16.msra.mxu0 0
        %664 = vmatprep.subr.bf16.mxu0 0
        %665 = vmatpush1.bf16.msra.mxu0 0
        %666 = vmatprep.subr.bf16.mxu0 0
        %667 = vmatpush1.bf16.msra.mxu0 0
        %668 = vmatprep.subr.bf16.mxu0 0
        %669 = vmatpush1.bf16.msra.mxu0 0
        %670 = vmatprep.subr.bf16.mxu0 0
        %671 = vmatpush1.bf16.msra.mxu0 0
        %672 = vmatprep.subr.bf16.mxu0 0
        %673 = vmatpush1.bf16.msra.mxu0 0
        %674 = vmatprep.subr.bf16.mxu0 0
        %675 = vmatpush1.bf16.msra.mxu0 0
        %676 = vmatprep.subr.bf16.mxu0 0
        %677 = vmatpush1.bf16.msra.mxu0 0
        %678 = vmatprep.subr.bf16.mxu0 0
        %679 = vmatpush1.bf16.msra.mxu0 0
        %680 = vmatprep.subr.bf16.mxu0 0
        %681 = vmatpush1.bf16.msra.mxu0 0
        %682 = vmatprep.subr.bf16.mxu0 0
        %683 = vmatpush1.bf16.msra.mxu0 0
        %684 = vmatprep.subr.bf16.mxu0 0
        %685 = vmatpush1.bf16.msra.mxu0 0
        %686 = vmatprep.subr.bf16.mxu0 0
        %687 = vmatpush1.bf16.msra.mxu0 0
        %688 = vmatprep.subr.bf16.mxu0 0
        %689 = vmatpush1.bf16.msra.mxu0 0
        %690 = vmatprep.mubr.bf16.mxu0 0
        %691 = vmatmul.mubr.bf16.gmra.mrb[0].mxu0 %v649
        %v692 = vpop.f32.mrb[0].mxu0
        %v693 = vadd.f32 0.0, %v692
        %v694 = vpop.f32.mrb[0].mxu0
        %v695 = vadd.f32 0.0, %v694
        %v696 = vpop.f32.mrb[0].mxu0
        %v697 = vpop.f32.mrb[0].mxu0
        %698 = vdwg.mxu0
        %s699 = smul.u32 %s31, 8
        %s700 = scalar_lea.vmem [#allocation2], %s699
        %v701 = vld [vmem:[%s700] sm:$0xff]
        %v702 = vmul.f32 %v701, %v693
        %v703 = vrcp.pop %v695
        %v704 = vmul.f32 %v702, %v703
        %v705 = vpack.c.bf16 %v704, %v704
        %v706 = vld [vmem:[#allocation10] sm:$0xf]
        %v707 = vld [vmem:[#allocation10 + $0x4] sm:$0xf]
        %v708 = vld [vmem:[#allocation10 + $0x8] sm:$0xf]
        %v709 = vld [vmem:[#allocation10 + $0xc] sm:$0xf]
        %v710 = vld [vmem:[#allocation10 + $0x10] sm:$0xf]
        %v711 = vld [vmem:[#allocation10 + $0x14] sm:$0xf]
        %v712 = vld [vmem:[#allocation10 + $0x18] sm:$0xf]
        %v713 = vld [vmem:[#allocation10 + $0x1c] sm:$0xf]
        %v714 = vld [vmem:[#allocation10 + $0x20] sm:$0xf]
        %v715 = vld [vmem:[#allocation10 + $0x24] sm:$0xf]
        %v716 = vld [vmem:[#allocation10 + $0x28] sm:$0xf]
        %v717 = vld [vmem:[#allocation10 + $0x2c] sm:$0xf]
        %v718 = vld [vmem:[#allocation10 + $0x30] sm:$0xf]
        %v719 = vld [vmem:[#allocation10 + $0x34] sm:$0xf]
        %v720 = vld [vmem:[#allocation10 + $0x38] sm:$0xf]
        %v721 = vld [vmem:[#allocation10 + $0x3c] sm:$0xf]
        %v722 = vld [vmem:[#allocation12] sm:$0x1]
        %v724 = vlaneseq
        %v725 = vshrl.u32 %v724, 7
        %v726 = vsub.s32 0, %v725
        %v727 = vrot.slane %v722, %v726
        %v745 = vunpack.c.l.b16 %v706
        %v746 = vunpack.c.l.b16 %v707
        %v747 = vunpack.c.l.b16 %v708
        %v748 = vunpack.c.l.b16 %v709
        %v749 = vunpack.c.l.b16 %v710
        %v750 = vunpack.c.l.b16 %v711
        %v751 = vunpack.c.l.b16 %v712
        %v752 = vunpack.c.l.b16 %v713
        %v753 = vunpack.c.l.b16 %v714
        %v754 = vunpack.c.l.b16 %v715
        %v755 = vunpack.c.l.b16 %v716
        %v756 = vunpack.c.l.b16 %v717
        %v757 = vunpack.c.l.b16 %v718
        %v758 = vunpack.c.l.b16 %v719
        %v759 = vunpack.c.l.b16 %v720
        %v760 = vunpack.c.l.b16 %v721
        %v761 = vpack.c.b16 %v746, %v745
        %v762 = vpack.c.b16 %v748, %v747
        %v763 = vpack.c.b16 %v750, %v749
        %v764 = vpack.c.b16 %v752, %v751
        %v765 = vpack.c.b16 %v754, %v753
        %v766 = vpack.c.b16 %v756, %v755
        %v767 = vpack.c.b16 %v758, %v757
        %v768 = vpack.c.b16 %v760, %v759
        %777 = vmatprep.subr.bf16.mxu0 0
        %778 = vmatpush1.bf16.msra.mxu0 %v761
        %779 = vmatprep.subr.bf16.mxu0 0
        %780 = vmatpush1.bf16.msra.mxu0 %v762
        %781 = vmatprep.subr.bf16.mxu0 0
        %782 = vmatpush1.bf16.msra.mxu0 %v763
        %783 = vmatprep.subr.bf16.mxu0 0
        %784 = vmatpush1.bf16.msra.mxu0 %v764
        %785 = vmatprep.subr.bf16.mxu0 0
        %786 = vmatpush1.bf16.msra.mxu0 %v765
        %787 = vmatprep.subr.bf16.mxu0 0
        %788 = vmatpush1.bf16.msra.mxu0 %v766
        %789 = vmatprep.subr.bf16.mxu0 0
        %790 = vmatpush1.bf16.msra.mxu0 %v767
        %791 = vmatprep.subr.bf16.mxu0 0
        %792 = vmatpush1.bf16.msra.mxu0 %v768
        %793 = vmatprep.subr.bf16.mxu0 0
        %794 = vmatpush1.bf16.msra.mxu0 0
        %795 = vmatprep.subr.bf16.mxu0 0
        %796 = vmatpush1.bf16.msra.mxu0 0
        %797 = vmatprep.subr.bf16.mxu0 0
        %798 = vmatpush1.bf16.msra.mxu0 0
        %799 = vmatprep.subr.bf16.mxu0 0
        %800 = vmatpush1.bf16.msra.mxu0 0
        %801 = vmatprep.subr.bf16.mxu0 0
        %802 = vmatpush1.bf16.msra.mxu0 0
        %803 = vmatprep.subr.bf16.mxu0 0
        %804 = vmatpush1.bf16.msra.mxu0 0
        %805 = vmatprep.subr.bf16.mxu0 0
        %806 = vmatpush1.bf16.msra.mxu0 0
        %807 = vmatprep.subr.bf16.mxu0 0
        %808 = vmatpush1.bf16.msra.mxu0 0
        %809 = vmatprep.mubr.bf16.mxu0 0
        %810 = vmatmul.mubr.bf16.gmra.mrb[0].mxu0 %v705
        %v811 = vpop.f32.mrb[0].mxu0
        %v812 = vadd.f32 %v727, %v811
        %v813 = vpop.f32.mrb[0].mxu0
        %v814 = vpop.f32.mrb[0].mxu0
        %v815 = vpop.f32.mrb[0].mxu0
        %816 = vdwg.mxu0
        %817 = vst [vmem:[%s354] sm:$0xff] %v812
        %s818 = sand.u32 %s184, 1
        %s819 = scalar_lea.sflag [#allocation6], %s818
        %s820 = sand.u32 %s184, 1
        %s821 = smul.addr %s820, 8
        %s822 = scalar_lea.vmem [#allocation15], %s821
        // Predicated region
        $region73: #{aft_full_forward.1} parent=43 // pred_check
          %p823 = pneg %p194
        $region74: #{aft_full_forward.1} parent=43 // pred_check_branch
          %825 = sbr.rel (%p823) target = $region76
        $region75: #{aft_full_forward.1} parent=43 // pred_region
          %s827 = ssub.s32 128, 128
          %828 = vsyncadd %s819, %s827
          %s829 = sadd.s32 %s31, %s30
          %s830 = smul.addr %s829, 128
          %s831 = scalar_lea.hbm %s6, %s830
          %s833 = sshll.u32 %s822, 4
          %s834 = int_to_ptr.vmem [resolvable:$true] %s833
          %836 = dma.vmem_to_hbm [thread:$0]  %s834, 128, %s831, %s819
        $region76: #{aft_full_forward.1} parent=43 // pred_fallthru
          _
      $region44: #{aft_full_forward.1} parent=5 // pred_fallthru
        _
      %p837 = scmp.le.s32.totalorder 2, %s21
      // Predicated region
      $region77: #{aft_full_forward.1} parent=5 // pred_check
        %p838 = pneg %p837
      $region78: #{aft_full_forward.1} parent=5 // pred_check_branch
        %840 = sbr.rel (%p838) target = $region80
      $region79: #{aft_full_forward.1} parent=5 // pred_region
        %s841 = ssub.s32 %s21, 2
        // Predicated region
        $region81: #{aft_full_forward.1} parent=79 // pred_check
          %p842 = pneg %p200
        $region82: #{aft_full_forward.1} parent=79 // pred_check_branch
          %844 = sbr.rel (%p842) target = $region84
        $region83: #{aft_full_forward.1} parent=79 // pred_region
          %s845 = sand.u32 %s185, 1
          %s846 = scalar_lea.sflag [#allocation6], %s845
          %s847 = sand.u32 %s185, 1
          %s848 = smul.addr %s847, 8
          %s849 = scalar_lea.vmem [#allocation15], %s848
          %850 = dma.done %s846, 128
        $region84: #{aft_full_forward.1} parent=79 // pred_fallthru
          _
      $region80: #{aft_full_forward.1} parent=5 // pred_fallthru
        _
    $region6: #{aft_full_forward.1} parent=1 // loop_footer
      %s25 = sadd.s32 1, %s21
    $region7: #{aft_full_forward.1} parent=1 // loop_footer_branch
      %20 = sbr.rel target = $region3
    $region8: #{aft_full_forward.1} parent=1 // loop_exit
      _
    %851 = vsyncpa [#allocation5], 1
    %s852 = scalar_lea.sflag [#allocation5], 1
    %853 = vsyncpa %s852, 1
    %854 = vsyncpa [#allocation8], 1
    %855 = vsyncpa [#allocation11], 1
    %856 = vsyncpa [#allocation14], 1
    %857 = vsyncpa [#allocation6], 1
    %s858 = scalar_lea.sflag [#allocation6], 1
    %859 = vsyncpa %s858, 1

</llo_original>
